<compile_context>
chip_gen: v7x
topology: tpu7x:2x2x1
jax: 0.10.0
libtpu: 0.0.40
codegen_flags: <defaults>
</compile_context>

<pallas_src>
import jax
import jax.numpy as jnp
from jax.experimental import pallas as pl
from jax.experimental.pallas import tpu as pltpu


def _round_up(v, m):
    return ((v + m - 1) // m) * m


def _pick_tile(n, cap):
    """Largest multiple of 128 that divides n (n itself a multiple of 128) and is <= cap."""
    t = max(128, min(cap, n))
    t -= t % 128
    while t > 128 and n % t:
        t -= 128
    return t


def _vmem_limit(est_bytes):
    return int(min(max(est_bytes * 3 // 2, 16 * 1024 * 1024), 48 * 1024 * 1024))


# ---------------------------------------------------------------------------
# Graph preprocessing: binary (A+I) int8 at padded shape + D^-1/2 column.
# Built once per graph (hoist / cache across forward calls).
# ---------------------------------------------------------------------------
def build_padded_graph(edge_index, num_nodes, n_pad=None):
    if n_pad is None:
        n_pad = _round_up(num_nodes, 128)
    row, col = edge_index[0], edge_index[1]
    a = jnp.zeros((n_pad, n_pad), jnp.int8)
    a = a.at[row, col].set(jnp.int8(1))
    idx = jnp.arange(num_nodes)
    a = a.at[idx, idx].set(jnp.int8(1))  # (re-)add self loops (PyG gcn_norm semantics)
    deg = jnp.sum(a.astype(jnp.float32), axis=1)
    d = jnp.where(deg > 0, jax.lax.rsqrt(deg), 0.0)  # padded rows: deg 0 -> scale 0
    return a, d[:, None].astype(jnp.float32)


# ---------------------------------------------------------------------------
# Kernel 1: feature transform  XW_scaled = diag(d^-1/2) @ (X @ W)   (row-tiled)
# ---------------------------------------------------------------------------
def _feature_transform_kernel(x_ref, w_ref, d_ref, o_ref):
    xw = jnp.dot(x_ref[...], w_ref[...], preferred_element_type=jnp.float32)
    o_ref[...] = (xw * d_ref[...]).astype(o_ref.dtype)


def _feature_transform(x_bf16, w_bf16, d_scale, tm):
    n, c = x_bf16.shape
    h = w_bf16.shape[1]
    est = 2 * tm * c * 2 + 2 * c * h * 2 + 2 * tm * h * 2 + 4 * tm * 4
    return pl.pallas_call(
        _feature_transform_kernel,
        out_shape=jax.ShapeDtypeStruct((n, h), jnp.bfloat16),
        grid=(n // tm,),
        in_specs=[
            pl.BlockSpec((tm, c), lambda i: (i, 0)),
            pl.BlockSpec((c, h), lambda i: (0, 0)),
            pl.BlockSpec((tm, 1), lambda i: (i, 0)),
        ],
        out_specs=pl.BlockSpec((tm, h), lambda i: (i, 0)),
        compiler_params=pltpu.CompilerParams(
            dimension_semantics=("parallel",),
            vmem_limit_bytes=_vmem_limit(est),
        ),
    )(x_bf16, w_bf16, d_scale)


# ---------------------------------------------------------------------------
# Kernel 2: aggregation  ELU(diag(d^-1/2) @ (A+I) @ XW_scaled + b)
#   - (A+I) streamed as int8, cast to bf16 in-kernel (exact 0/1)
#   - XW fully VMEM-resident (sliced with pl.ds) or streamed per K tile
#   - f32 output accumulates directly into o_ref; bf16 output uses an f32 scratch
# ---------------------------------------------------------------------------
def _make_aggregate_kernel(tk, resident_xw, use_scratch):
    def kernel(a_ref, xw_ref, d_ref, b_ref, o_ref, *scratch):
        k = pl.program_id(1)
        acc = scratch[0] if use_scratch else o_ref

        @pl.when(k == 0)
        def _init():
            acc[...] = jnp.zeros_like(acc)

        if resident_xw:
            start = pl.multiple_of(k * tk, tk)
            xw = xw_ref[pl.ds(start, tk), :]
        else:
            xw = xw_ref[...]

        acc[...] += jnp.dot(
            a_ref[...].astype(jnp.bfloat16), xw, preferred_element_type=jnp.float32
        )

        @pl.when(k == pl.num_programs(1) - 1)
        def _finalize():
            v = acc[...] * d_ref[...] + b_ref[...]
            # ELU(alpha=1): v if v > 0 else exp(v) - 1
            o_ref[...] = jnp.where(v > 0, v, jnp.exp(v) - 1.0).astype(o_ref.dtype)

    return kernel


def _gcn_aggregate(a_i8, xw_bf16, d_scale, bias, *, tm, tk, out_dtype, resident_xw):
    n = a_i8.shape[0]
    h = xw_bf16.shape[1]
    use_scratch = out_dtype != jnp.float32
    out_bytes = jnp.dtype(out_dtype).itemsize
    est = (
        2 * tm * tk                                            # int8 A tiles (x2 buffers)
        + (2 * n * h * 2 if resident_xw else 2 * tk * h * 2)   # XW resident / streamed
        + 2 * tm * h * out_bytes                               # output tiles
        + (tm * h * 4 if use_scratch else 0)                   # f32 accumulator scratch
        + 4 * (tm + h) * 4
    )
    xw_spec = (
        pl.BlockSpec((n, h), lambda i, k: (0, 0))
        if resident_xw
        else pl.BlockSpec((tk, h), lambda i, k: (k, 0))
    )
    return pl.pallas_call(
        _make_aggregate_kernel(tk, resident_xw, use_scratch),
        out_shape=jax.ShapeDtypeStruct((n, h), out_dtype),
        grid=(n // tm, n // tk),
        in_specs=[
            pl.BlockSpec((tm, tk), lambda i, k: (i, k)),   # binary (A+I) tile, int8
            xw_spec,
            pl.BlockSpec((tm, 1), lambda i, k: (i, 0)),    # d_i^-1/2 row scale
            pl.BlockSpec((1, h), lambda i, k: (0, 0)),     # bias (broadcast)
        ],
        out_specs=pl.BlockSpec((tm, h), lambda i, k: (i, 0)),  # resident across K
        scratch_shapes=[pltpu.VMEM((tm, h), jnp.float32)] if use_scratch else [],
        compiler_params=pltpu.CompilerParams(
            dimension_semantics=("parallel", "arbitrary"),
            vmem_limit_bytes=_vmem_limit(est),
        ),
    )(a_i8, xw_bf16, d_scale, bias)


# ---------------------------------------------------------------------------
# Kernel 3: fused two-layer path for small graphs (one pallas_call, no grid)
# ---------------------------------------------------------------------------
def _fused_two_layer_kernel(a_ref, x_ref, w1_ref, b1_ref, w2_ref, b2_ref, d_ref, o_ref):
    a = a_ref[...].astype(jnp.bfloat16)
    d = d_ref[...]

    def layer(h_in_bf16, w_ref, b_ref):
        xw = jnp.dot(h_in_bf16, w_ref[...], preferred_element_type=jnp.float32) * d
        agg = jnp.dot(a, xw.astype(jnp.bfloat16), preferred_element_type=jnp.float32)
        v = agg * d + b_ref[...]
        return jnp.where(v > 0, v, jnp.exp(v) - 1.0)

    h1 = layer(x_ref[...], w1_ref, b1_ref)
    o_ref[...] = layer(h1.astype(jnp.bfloat16), w2_ref, b2_ref).astype(o_ref.dtype)


# ---------------------------------------------------------------------------
# Forward pass (2-layer GCN, ELU, dropout = identity in eval mode, bn = Identity)
# ---------------------------------------------------------------------------
def gnn_encoder_forward(a_plus_i_i8, d_inv_sqrt, x, w1, b1, w2, b2, *,
                        force_tiled=False,
                        xw_resident_limit_bytes=8 * 1024 * 1024,
                        tile_m_cap=1024, tile_k_cap=2048):
    """ELU(A_hat @ (ELU(A_hat @ (x@W1) + b1) @ W2) + b2) with A_hat = D^-1/2 (A+I) D^-1/2.

    a_plus_i_i8: [n_pad, n_pad] int8 binary (A+I) (padded rows/cols zero).
    d_inv_sqrt:  [n_pad, 1] f32 deg^-1/2 (zero on padded rows).
    """
    n_pad = a_plus_i_i8.shape[0]
    n = x.shape[0]
    c_out = w2.shape[1]
    cin_p = _round_up(x.shape[1], 128)
    h_p = _round_up(w1.shape[1], 128)
    cout_p = _round_up(c_out, 128)

    def pad2(arr, r, c, dtype):
        return jnp.pad(arr, ((0, r - arr.shape[0]), (0, c - arr.shape[1]))).astype(dtype)

    x_p = pad2(x, n_pad, cin_p, jnp.bfloat16)
    w1_p = pad2(w1, cin_p, h_p, jnp.bfloat16)
    b1_p = pad2(b1, 1, h_p, jnp.float32)
    w2_p = pad2(w2, h_p, cout_p, jnp.bfloat16)
    b2_p = pad2(b2, 1, cout_p, jnp.float32)

    small = (not force_tiled) and n_pad <= 1024 and max(cin_p, h_p, cout_p) <= 512
    if small:
        est = 3 * n_pad * n_pad + 20 * n_pad * max(cin_p, h_p, cout_p) + (1 << 20)
        out = pl.pallas_call(
            _fused_two_layer_kernel,
            out_shape=jax.ShapeDtypeStruct((n_pad, cout_p), jnp.float32),
            compiler_params=pltpu.CompilerParams(vmem_limit_bytes=_vmem_limit(est)),
        )(a_plus_i_i8, x_p, w1_p, b1_p, w2_p, b2_p, d_inv_sqrt)
        return out[:n, :c_out]

    # ---- tiled path --------------------------------------------------------
    tm = _pick_tile(n_pad, tile_m_cap)
    if n_pad // tm < 2 and n_pad >= 256:   # keep >= 2 row blocks for megacore sharding
        tm = _pick_tile(n_pad, tm // 2)
    tk = _pick_tile(n_pad, tile_k_cap)

    # Layer 1: h1 = ELU(A_hat @ (x @ W1) + b1), emitted in bf16
    xw1 = _feature_transform(x_p, w1_p, d_inv_sqrt, tm)
    h1 = _gcn_aggregate(a_plus_i_i8, xw1, d_inv_sqrt, b1_p, tm=tm, tk=tk,
                        out_dtype=jnp.bfloat16,
                        resident_xw=2 * n_pad * h_p * 2 <= xw_resident_limit_bytes)
    # TODO(synk): the layer-2 feature transform could be fused into the layer-1 finalize
    # (second output) to remove the h1 HBM round trip entirely.
    # Layer 2: f32 output, accumulates directly into o_ref (no scratch)
    xw2 = _feature_transform(h1, w2_p, d_inv_sqrt, tm)
    h2 = _gcn_aggregate(a_plus_i_i8, xw2, d_inv_sqrt, b2_p, tm=tm, tk=tk,
                        out_dtype=jnp.float32,
                        resident_xw=2 * n_pad * cout_p * 2 <= xw_resident_limit_bytes)
    return h2[:n, :c_out]


# ---------------------------------------------------------------------------
# Plain-JAX reference (f32) for validation
# ---------------------------------------------------------------------------
def _reference_forward(a_i8, d_inv_sqrt, x, w1, b1, w2, b2):
    n = x.shape[0]
    d = d_inv_sqrt[:n, 0]
    a_hat = d[:, None] * a_i8[:n, :n].astype(jnp.float32) * d[None, :]
    elu = lambda v: jnp.where(v > 0, v, jnp.exp(v) - 1.0)
    h = elu(a_hat @ (x @ w1) + b1)
    return elu(a_hat @ (h @ w2) + b2)


if __name__ == "__main__":
    key = jax.random.PRNGKey(0)
    k_x, k_w1, k_w2, k_x2, k_e = jax.random.split(key, 5)

    C_IN, C_HID, C_OUT = 16, 32, 32
    w1 = jax.random.normal(k_w1, (C_IN, C_HID), jnp.float32) * (1.0 / jnp.sqrt(C_IN))
    b1 = jnp.zeros((1, C_HID), jnp.float32)   # GCNConv bias starts at zero
    w2 = jax.random.normal(k_w2, (C_HID, C_OUT), jnp.float32) * (1.0 / jnp.sqrt(C_HID))
    b2 = jnp.zeros((1, C_OUT), jnp.float32)

    def ring_edges(num):
        src = jnp.arange(num, dtype=jnp.int32)
        dst = (src + 1) % num
        return jnp.stack(
            [jnp.concatenate([src, dst]), jnp.concatenate([dst, src])], axis=0)

    # --- small graph: fused single-kernel path ------------------------------
    N1 = 32
    x1 = jax.random.normal(k_x, (N1, C_IN), jnp.float32)
    a1, d1 = build_padded_graph(ring_edges(N1), N1)
    out1 = gnn_encoder_forward(a1, d1, x1, w1, b1, w2, b2)
    jax.block_until_ready(out1)
    exp1 = _reference_forward(a1, d1, x1, w1, b1, w2, b2)
    assert out1.shape == (N1, C_OUT)
    assert jnp.allclose(out1, exp1, atol=5e-2, rtol=5e-2), float(jnp.max(jnp.abs(out1 - exp1)))

    # --- larger graph: exercise the tiled path (multi-step K reduction),
    #     with VMEM-resident XW and with streamed XW -------------------------
    N2 = 300
    x2 = jax.random.normal(k_x2, (N2, C_IN), jnp.float32)
    extra = jax.random.randint(k_e, (2, 256), 0, N2, dtype=jnp.int32)
    extra_rev = jnp.stack([extra[1], extra[0]], axis=0)
    e2 = jnp.concatenate([ring_edges(N2), extra, extra_rev], axis=1)
    a2, d2 = build_padded_graph(e2, N2)
    exp2 = _reference_forward(a2, d2, x2, w1, b1, w2, b2)

    out2_res = gnn_encoder_forward(a2, d2, x2, w1, b1, w2, b2,
                                   force_tiled=True, tile_k_cap=128)
    out2_str = gnn_encoder_forward(a2, d2, x2, w1, b1, w2, b2,
                                   force_tiled=True, tile_k_cap=128,
                                   xw_resident_limit_bytes=0)
    jax.block_until_ready((out2_res, out2_str))
    assert jnp.allclose(out2_res, exp2, atol=5e-2, rtol=5e-2), \
        float(jnp.max(jnp.abs(out2_res - exp2)))
    assert jnp.allclose(out2_str, exp2, atol=5e-2, rtol=5e-2), \
        float(jnp.max(jnp.abs(out2_str - exp2)))

    # TODO(synk): nn.Dropout is applied in eval (identity) mode; stochastic training
    # dropout is not reproduced here.
    # TODO(synk): for very large sparse graphs, the dense (A+I) aggregation should become a
    # scalar-prefetch neighbor-list gather (PrefetchScalarGridSpec) instead of N^2 dense.
    print("KERNEL_OK")
</pallas_src>

<mosaic_0001>
module attributes {stable_mosaic.version = 11 : i64} {
  func.func @_fused_two_layer_kernel(%arg0: memref<128x128xi8, #tpu.memory_space<vmem>>, %arg1: memref<128x128xbf16, #tpu.memory_space<vmem>>, %arg2: memref<128x128xbf16, #tpu.memory_space<vmem>>, %arg3: memref<1x128xf32, #tpu.memory_space<vmem>>, %arg4: memref<128x128xbf16, #tpu.memory_space<vmem>>, %arg5: memref<1x128xf32, #tpu.memory_space<vmem>>, %arg6: memref<128x1xf32, #tpu.memory_space<vmem>>, %arg7: memref<128x128xf32, #tpu.memory_space<vmem>>) attributes {dimension_semantics = [], scalar_prefetch = 0 : i64, scratch_operands = 0 : i64, tpu.core_type = #tpu.core_type<tc>} {
    %c0 = arith.constant 0 : index
    %c0_0 = arith.constant 0 : index
    %0 = vector.load %arg0[%c0, %c0_0] : memref<128x128xi8, #tpu.memory_space<vmem>>, vector<128x128xi8>
    %1 = arith.sitofp %0 : vector<128x128xi8> to vector<128x128xbf16>
    %c0_1 = arith.constant 0 : index
    %c0_2 = arith.constant 0 : index
    %2 = vector.load %arg6[%c0_1, %c0_2] : memref<128x1xf32, #tpu.memory_space<vmem>>, vector<128x1xf32>
    %c0_3 = arith.constant 0 : index
    %c0_4 = arith.constant 0 : index
    %3 = vector.load %arg1[%c0_3, %c0_4] : memref<128x128xbf16, #tpu.memory_space<vmem>>, vector<128x128xbf16>
    %c0_5 = arith.constant 0 : index
    %c0_6 = arith.constant 0 : index
    %4 = vector.load %arg2[%c0_5, %c0_6] : memref<128x128xbf16, #tpu.memory_space<vmem>>, vector<128x128xbf16>
    %cst = arith.constant dense<0.000000e+00> : vector<128x128xf32>
    %5 = tpu.matmul %3, %4, %cst {dimension_numbers = #tpu.dot_dimension_numbers<[1], [0], [0], [1], [0, 0, 1, 1], [], []>} : vector<128x128xbf16>, vector<128x128xbf16>, vector<128x128xf32> -> vector<128x128xf32>
    %6 = vector.broadcast %2 : vector<128x1xf32> to vector<128x128xf32>
    %7 = arith.mulf %5, %6 : vector<128x128xf32>
    %8 = arith.truncf %7 : vector<128x128xf32> to vector<128x128xbf16>
    %cst_7 = arith.constant dense<0.000000e+00> : vector<128x128xf32>
    %9 = tpu.matmul %1, %8, %cst_7 {dimension_numbers = #tpu.dot_dimension_numbers<[1], [0], [0], [1], [0, 0, 1, 1], [], []>} : vector<128x128xbf16>, vector<128x128xbf16>, vector<128x128xf32> -> vector<128x128xf32>
    %10 = vector.broadcast %2 : vector<128x1xf32> to vector<128x128xf32>
    %11 = arith.mulf %9, %10 : vector<128x128xf32>
    %c0_8 = arith.constant 0 : index
    %c0_9 = arith.constant 0 : index
    %12 = vector.load %arg3[%c0_8, %c0_9] : memref<1x128xf32, #tpu.memory_space<vmem>>, vector<1x128xf32>
    %13 = vector.broadcast %12 : vector<1x128xf32> to vector<128x128xf32>
    %14 = arith.addf %11, %13 : vector<128x128xf32>
    %cst_10 = arith.constant 0.000000e+00 : f32
    %15 = vector.broadcast %cst_10 : f32 to vector<128x128xf32>
    %16 = arith.cmpf ogt, %14, %15 : vector<128x128xf32>
    %17 = math.exp %14 : vector<128x128xf32>
    %cst_11 = arith.constant 1.000000e+00 : f32
    %18 = vector.broadcast %cst_11 : f32 to vector<128x128xf32>
    %19 = arith.subf %17, %18 : vector<128x128xf32>
    %20 = arith.select %16, %14, %19 : vector<128x128xi1>, vector<128x128xf32>
    %21 = arith.truncf %20 : vector<128x128xf32> to vector<128x128xbf16>
    %c0_12 = arith.constant 0 : index
    %c0_13 = arith.constant 0 : index
    %22 = vector.load %arg4[%c0_12, %c0_13] : memref<128x128xbf16, #tpu.memory_space<vmem>>, vector<128x128xbf16>
    %cst_14 = arith.constant dense<0.000000e+00> : vector<128x128xf32>
    %23 = tpu.matmul %21, %22, %cst_14 {dimension_numbers = #tpu.dot_dimension_numbers<[1], [0], [0], [1], [0, 0, 1, 1], [], []>} : vector<128x128xbf16>, vector<128x128xbf16>, vector<128x128xf32> -> vector<128x128xf32>
    %24 = vector.broadcast %2 : vector<128x1xf32> to vector<128x128xf32>
    %25 = arith.mulf %23, %24 : vector<128x128xf32>
    %26 = arith.truncf %25 : vector<128x128xf32> to vector<128x128xbf16>
    %cst_15 = arith.constant dense<0.000000e+00> : vector<128x128xf32>
    %27 = tpu.matmul %1, %26, %cst_15 {dimension_numbers = #tpu.dot_dimension_numbers<[1], [0], [0], [1], [0, 0, 1, 1], [], []>} : vector<128x128xbf16>, vector<128x128xbf16>, vector<128x128xf32> -> vector<128x128xf32>
    %28 = vector.broadcast %2 : vector<128x1xf32> to vector<128x128xf32>
    %29 = arith.mulf %27, %28 : vector<128x128xf32>
    %c0_16 = arith.constant 0 : index
    %c0_17 = arith.constant 0 : index
    %30 = vector.load %arg5[%c0_16, %c0_17] : memref<1x128xf32, #tpu.memory_space<vmem>>, vector<1x128xf32>
    %31 = vector.broadcast %30 : vector<1x128xf32> to vector<128x128xf32>
    %32 = arith.addf %29, %31 : vector<128x128xf32>
    %cst_18 = arith.constant 0.000000e+00 : f32
    %33 = vector.broadcast %cst_18 : f32 to vector<128x128xf32>
    %34 = arith.cmpf ogt, %32, %33 : vector<128x128xf32>
    %35 = math.exp %32 : vector<128x128xf32>
    %cst_19 = arith.constant 1.000000e+00 : f32
    %36 = vector.broadcast %cst_19 : f32 to vector<128x128xf32>
    %37 = arith.subf %35, %36 : vector<128x128xf32>
    %38 = arith.select %34, %32, %37 : vector<128x128xi1>, vector<128x128xf32>
    %c0_20 = arith.constant 0 : index
    %c0_21 = arith.constant 0 : index
    %39 = vector.load %arg7[%c0_20, %c0_21] : memref<128x128xf32, #tpu.memory_space<vmem>>, vector<128x128xf32>
    tpu.vector_store %arg7[%c0_20, %c0_21], %38 {strides = array<i32>} : memref<128x128xf32, #tpu.memory_space<vmem>>, vector<128x128xf32>,
    return
  }
}

</mosaic_0001>

<llo_original>
// kernel: tpu_custom_call.1
$region0: #{tpu_custom_call.1}
  #allocation0 [shape = 'u32[]', space=smem, size = 0x4, offset = 0x4, fixed_abs, tag = 'smem constant byte address 0x4 - core index']
  #allocation1 [shape = 'u32[144,128]{1,0:T(1,128)}', space=vmem, size = 0x12000, scoped, tag = 'internal scratch']
  %s0 = inlined_call_operand.hbm [shape: s8[128,128], index: 0, kind: input, shape index: {}]
  %s1 = inlined_call_operand.vmem [shape: bf16[128,128], index: 1, kind: input, shape index: {}]
  %s2 = inlined_call_operand.vmem [shape: bf16[128,128], index: 2, kind: input, shape index: {}]
  %s3 = inlined_call_operand.vmem [shape: f32[1,128], index: 3, kind: input, shape index: {}]
  %s4 = inlined_call_operand.hbm [shape: bf16[128,128], index: 4, kind: input, shape index: {}]
  %s5 = inlined_call_operand.vmem [shape: f32[1,128], index: 5, kind: input, shape index: {}]
  %s6 = inlined_call_operand.vmem [shape: f32[128,1], index: 6, kind: input, shape index: {}]
  %s7 = inlined_call_operand.hbm [shape: f32[128,128], index: 7, kind: output, shape index: {}]
  %s8 = sld [smem:[#allocation0]]
  $region46: #{tpu_custom_call.1} parent=0
    _
  %s10 = ssub.s32 1, %s8
  %s11 = scalar_select 0, %s10, %s8
  $region1: #{tpu_custom_call.1} parent=0
    #allocation2 [shape = 'u8[16384]{0}', space=vmem, size = 0x4000, scoped, tag = 'input window, operand 0, single buffered']
    #allocation3 [shape = 's32[1]{0}', space=sflag, size = 0x4, scoped, tag = 'scoped memory for tpu_custom_call.1']
    #allocation4 [shape = 's32[1]{0}', space=sflag, size = 0x4, scoped, tag = 'scoped memory for tpu_custom_call.1']
    #allocation5 [shape = 'u8[32768]{0}', space=vmem, size = 0x8000, scoped, tag = 'input window, operand 4, single buffered']
    #allocation6 [shape = 's32[1]{0}', space=sflag, size = 0x4, scoped, tag = 'scoped memory for tpu_custom_call.1']
    #allocation7 [shape = 'u8[65536]{0}', space=vmem, size = 0x10000, scoped, tag = 'output window, operand 0, single buffered']
    %12 = vsyncpa [#allocation3], 0
    %13 = vsyncpa [#allocation6], 0
    %14 = vsyncpa [#allocation4], 0
    // Predicated region
    $region2: #{tpu_custom_call.1} parent=1 // pred_check
      _
    $region3: #{tpu_custom_call.1} parent=1 // pred_check_branch
      %16 = sbr.rel (0) target = $region5
    $region4: #{tpu_custom_call.1} parent=1 // pred_region
      %s18 = ssub.s32 512, 512
      %19 = vsyncadd [#allocation3], %s18
      %s20 = sshll.u32 [#allocation2], 4
      %s21 = int_to_ptr.vmem [resolvable:$true] %s20
      %26 = dma.hbm_to_vmem [thread:$0]  %s0, 512, %s21, [#allocation3], 128, 128, 8
    $region5: #{tpu_custom_call.1} parent=1 // pred_fallthru
      _
    // Predicated region
    $region6: #{tpu_custom_call.1} parent=1 // pred_check
      _
    $region7: #{tpu_custom_call.1} parent=1 // pred_check_branch
      %28 = sbr.rel (0) target = $region9
    $region8: #{tpu_custom_call.1} parent=1 // pred_region
      _
    $region9: #{tpu_custom_call.1} parent=1 // pred_fallthru
      _
    // Predicated region
    $region10: #{tpu_custom_call.1} parent=1 // pred_check
      _
    $region11: #{tpu_custom_call.1} parent=1 // pred_check_branch
      %30 = sbr.rel (0) target = $region13
    $region12: #{tpu_custom_call.1} parent=1 // pred_region
      _
    $region13: #{tpu_custom_call.1} parent=1 // pred_fallthru
      _
    // Predicated region
    $region14: #{tpu_custom_call.1} parent=1 // pred_check
      _
    $region15: #{tpu_custom_call.1} parent=1 // pred_check_branch
      %32 = sbr.rel (0) target = $region17
    $region16: #{tpu_custom_call.1} parent=1 // pred_region
      _
    $region17: #{tpu_custom_call.1} parent=1 // pred_fallthru
      _
    // Predicated region
    $region18: #{tpu_custom_call.1} parent=1 // pred_check
      _
    $region19: #{tpu_custom_call.1} parent=1 // pred_check_branch
      %34 = sbr.rel (0) target = $region21
    $region20: #{tpu_custom_call.1} parent=1 // pred_region
      %s36 = ssub.s32 1024, 1024
      %37 = vsyncadd [#allocation6], %s36
      %s38 = sshll.u32 [#allocation5], 4
      %s39 = int_to_ptr.vmem [resolvable:$true] %s38
      %44 = dma.hbm_to_vmem [thread:$0]  %s4, 1024, %s39, [#allocation6], 64, 64, 4
    $region21: #{tpu_custom_call.1} parent=1 // pred_fallthru
      _
    // Predicated region
    $region22: #{tpu_custom_call.1} parent=1 // pred_check
      _
    $region23: #{tpu_custom_call.1} parent=1 // pred_check_branch
      %46 = sbr.rel (0) target = $region25
    $region24: #{tpu_custom_call.1} parent=1 // pred_region
      _
    $region25: #{tpu_custom_call.1} parent=1 // pred_fallthru
      _
    // Predicated region
    $region26: #{tpu_custom_call.1} parent=1 // pred_check
      _
    $region27: #{tpu_custom_call.1} parent=1 // pred_check_branch
      %48 = sbr.rel (0) target = $region29
    $region28: #{tpu_custom_call.1} parent=1 // pred_region
      _
    $region29: #{tpu_custom_call.1} parent=1 // pred_fallthru
      _
    // Predicated region
    $region30: #{tpu_custom_call.1} parent=1 // pred_check
      _
    $region31: #{tpu_custom_call.1} parent=1 // pred_check_branch
      %50 = sbr.rel (0) target = $region33
    $region32: #{tpu_custom_call.1} parent=1 // pred_region
      %51 = dma.done [#allocation3], 512
    $region33: #{tpu_custom_call.1} parent=1 // pred_fallthru
      _
    // Predicated region
    $region34: #{tpu_custom_call.1} parent=1 // pred_check
      _
    $region35: #{tpu_custom_call.1} parent=1 // pred_check_branch
      %53 = sbr.rel (0) target = $region37
    $region36: #{tpu_custom_call.1} parent=1 // pred_region
      %54 = dma.done [#allocation6], 1024
    $region37: #{tpu_custom_call.1} parent=1 // pred_fallthru
      _
    %v56 = vld [vmem:[#allocation2] sm:$0xff]
    %v57 = vld [vmem:[#allocation2 + $0x8] sm:$0xff]
    %v58 = vld [vmem:[#allocation2 + $0x10] sm:$0xff]
    %v59 = vld [vmem:[#allocation2 + $0x18] sm:$0xff]
    %v60 = vunpack.c.l.s8.bf16 %v56
    %v61 = vunpack.c.h.s8.bf16 %v56
    %v62 = vunpack.c.l.s8.bf16 %v57
    %v63 = vunpack.c.h.s8.bf16 %v57
    %v64 = vunpack.c.l.s8.bf16 %v58
    %v65 = vunpack.c.h.s8.bf16 %v58
    %v66 = vunpack.c.l.s8.bf16 %v59
    %v67 = vunpack.c.h.s8.bf16 %v59
    %v68 = vld [vmem:[%s6] sm:$0xff]
    %v69 = vld [vmem:[%s6 + $0x8] sm:$0xff]
    %v70 = vld [vmem:[%s6 + $0x10] sm:$0xff]
    %v71 = vld [vmem:[%s6 + $0x18] sm:$0xff]
    %v72 = vld [vmem:[%s6 + $0x20] sm:$0xff]
    %v73 = vld [vmem:[%s6 + $0x28] sm:$0xff]
    %v74 = vld [vmem:[%s6 + $0x30] sm:$0xff]
    %v75 = vld [vmem:[%s6 + $0x38] sm:$0xff]
    %v76 = vld [vmem:[%s6 + $0x40] sm:$0xff]
    %v77 = vld [vmem:[%s6 + $0x48] sm:$0xff]
    %v78 = vld [vmem:[%s6 + $0x50] sm:$0xff]
    %v79 = vld [vmem:[%s6 + $0x58] sm:$0xff]
    %v80 = vld [vmem:[%s6 + $0x60] sm:$0xff]
    %v81 = vld [vmem:[%s6 + $0x68] sm:$0xff]
    %v82 = vld [vmem:[%s6 + $0x70] sm:$0xff]
    %v83 = vld [vmem:[%s6 + $0x78] sm:$0xff]
    %v84 = vld [vmem:[%s1] sm:$0xf]
    %v85 = vld [vmem:[%s1 + $0x4] sm:$0xf]
    %v86 = vld [vmem:[%s1 + $0x8] sm:$0xf]
    %v87 = vld [vmem:[%s1 + $0xc] sm:$0xf]
    %v88 = vld [vmem:[%s1 + $0x10] sm:$0xf]
    %v89 = vld [vmem:[%s1 + $0x14] sm:$0xf]
    %v90 = vld [vmem:[%s1 + $0x18] sm:$0xf]
    %v91 = vld [vmem:[%s1 + $0x1c] sm:$0xf]
    %v92 = vld [vmem:[%s1 + $0x20] sm:$0xf]
    %v93 = vld [vmem:[%s1 + $0x24] sm:$0xf]
    %v94 = vld [vmem:[%s1 + $0x28] sm:$0xf]
    %v95 = vld [vmem:[%s1 + $0x2c] sm:$0xf]
    %v96 = vld [vmem:[%s1 + $0x30] sm:$0xf]
    %v97 = vld [vmem:[%s1 + $0x34] sm:$0xf]
    %v98 = vld [vmem:[%s1 + $0x38] sm:$0xf]
    %v99 = vld [vmem:[%s1 + $0x3c] sm:$0xf]
    %v100 = vld [vmem:[%s2] sm:$0xf]
    %v101 = vld [vmem:[%s2 + $0x4] sm:$0xf]
    %v102 = vld [vmem:[%s2 + $0x8] sm:$0xf]
    %v103 = vld [vmem:[%s2 + $0xc] sm:$0xf]
    %v104 = vld [vmem:[%s2 + $0x10] sm:$0xf]
    %v105 = vld [vmem:[%s2 + $0x14] sm:$0xf]
    %v106 = vld [vmem:[%s2 + $0x18] sm:$0xf]
    %v107 = vld [vmem:[%s2 + $0x1c] sm:$0xf]
    %v108 = vld [vmem:[%s2 + $0x20] sm:$0xf]
    %v109 = vld [vmem:[%s2 + $0x24] sm:$0xf]
    %v110 = vld [vmem:[%s2 + $0x28] sm:$0xf]
    %v111 = vld [vmem:[%s2 + $0x2c] sm:$0xf]
    %v112 = vld [vmem:[%s2 + $0x30] sm:$0xf]
    %v113 = vld [vmem:[%s2 + $0x34] sm:$0xf]
    %v114 = vld [vmem:[%s2 + $0x38] sm:$0xf]
    %v115 = vld [vmem:[%s2 + $0x3c] sm:$0xf]
    %v132 = vunpack.c.l.b16 %v84
    %v133 = vunpack.c.l.b16 %v85
    %v134 = vunpack.c.l.b16 %v86
    %v135 = vunpack.c.l.b16 %v87
    %v136 = vunpack.c.l.b16 %v88
    %v137 = vunpack.c.l.b16 %v89
    %v138 = vunpack.c.l.b16 %v90
    %v139 = vunpack.c.l.b16 %v91
    %v140 = vunpack.c.l.b16 %v92
    %v141 = vunpack.c.l.b16 %v93
    %v142 = vunpack.c.l.b16 %v94
    %v143 = vunpack.c.l.b16 %v95
    %v144 = vunpack.c.l.b16 %v96
    %v145 = vunpack.c.l.b16 %v97
    %v146 = vunpack.c.l.b16 %v98
    %v147 = vunpack.c.l.b16 %v99
    %v148 = vpack.c.b16 %v133, %v132
    %v149 = vpack.c.b16 %v135, %v134
    %v150 = vpack.c.b16 %v137, %v136
    %v151 = vpack.c.b16 %v139, %v138
    %v152 = vpack.c.b16 %v141, %v140
    %v153 = vpack.c.b16 %v143, %v142
    %v154 = vpack.c.b16 %v145, %v144
    %v155 = vpack.c.b16 %v147, %v146
    %v180 = vunpack.c.l.b16 %v100
    %v181 = vunpack.c.l.b16 %v101
    %v182 = vunpack.c.l.b16 %v102
    %v183 = vunpack.c.l.b16 %v103
    %v184 = vunpack.c.l.b16 %v104
    %v185 = vunpack.c.l.b16 %v105
    %v186 = vunpack.c.l.b16 %v106
    %v187 = vunpack.c.l.b16 %v107
    %v188 = vunpack.c.l.b16 %v108
    %v189 = vunpack.c.l.b16 %v109
    %v190 = vunpack.c.l.b16 %v110
    %v191 = vunpack.c.l.b16 %v111
    %v192 = vunpack.c.l.b16 %v112
    %v193 = vunpack.c.l.b16 %v113
    %v194 = vunpack.c.l.b16 %v114
    %v195 = vunpack.c.l.b16 %v115
    %v196 = vpack.c.b16 %v181, %v180
    %v197 = vpack.c.b16 %v183, %v182
    %v198 = vpack.c.b16 %v185, %v184
    %v199 = vpack.c.b16 %v187, %v186
    %v200 = vpack.c.b16 %v189, %v188
    %v201 = vpack.c.b16 %v191, %v190
    %v202 = vpack.c.b16 %v193, %v192
    %v203 = vpack.c.b16 %v195, %v194
    %212 = vmatprep.subr.bf16.mxu0 0
    %213 = vmatpush1.bf16.msra.mxu0 %v196
    %214 = vmatprep.subr.bf16.mxu0 0
    %215 = vmatpush1.bf16.msra.mxu0 %v197
    %216 = vmatprep.subr.bf16.mxu0 0
    %217 = vmatpush1.bf16.msra.mxu0 %v198
    %218 = vmatprep.subr.bf16.mxu0 0
    %219 = vmatpush1.bf16.msra.mxu0 %v199
    %220 = vmatprep.subr.bf16.mxu0 0
    %221 = vmatpush1.bf16.msra.mxu0 %v200
    %222 = vmatprep.subr.bf16.mxu0 0
    %223 = vmatpush1.bf16.msra.mxu0 %v201
    %224 = vmatprep.subr.bf16.mxu0 0
    %225 = vmatpush1.bf16.msra.mxu0 %v202
    %226 = vmatprep.subr.bf16.mxu0 0
    %227 = vmatpush1.bf16.msra.mxu0 %v203
    %228 = vmatprep.subr.bf16.mxu0 0
    %229 = vmatpush1.bf16.msra.mxu0 0
    %230 = vmatprep.subr.bf16.mxu0 0
    %231 = vmatpush1.bf16.msra.mxu0 0
    %232 = vmatprep.subr.bf16.mxu0 0
    %233 = vmatpush1.bf16.msra.mxu0 0
    %234 = vmatprep.subr.bf16.mxu0 0
    %235 = vmatpush1.bf16.msra.mxu0 0
    %236 = vmatprep.subr.bf16.mxu0 0
    %237 = vmatpush1.bf16.msra.mxu0 0
    %238 = vmatprep.subr.bf16.mxu0 0
    %239 = vmatpush1.bf16.msra.mxu0 0
    %240 = vmatprep.subr.bf16.mxu0 0
    %241 = vmatpush1.bf16.msra.mxu0 0
    %242 = vmatprep.subr.bf16.mxu0 0
    %243 = vmatpush1.bf16.msra.mxu0 0
    %244 = vmatprep.mubr.bf16.mxu0 0
    %245 = vmatmul.mubr.bf16.gmra.mrb[0].mxu0 %v148
    %v246 = vpop.f32.mrb[0].mxu0
    %v247 = vadd.f32 0.0, %v246
    %v248 = vpop.f32.mrb[0].mxu0
    %v249 = vpop.f32.mrb[0].mxu0
    %v250 = vadd.f32 0.0, %v249
    %v251 = vpop.f32.mrb[0].mxu0
    %252 = vmatprep.mubr.bf16.mxu0 0
    %253 = vmatmul.mubr.bf16.gmra.mrb[0].mxu0 %v149
    %v254 = vpop.f32.mrb[0].mxu0
    %v255 = vadd.f32 0.0, %v254
    %v256 = vpop.f32.mrb[0].mxu0
    %v257 = vpop.f32.mrb[0].mxu0
    %v258 = vadd.f32 0.0, %v257
    %v259 = vpop.f32.mrb[0].mxu0
    %260 = vmatprep.mubr.bf16.mxu0 0
    %261 = vmatmul.mubr.bf16.gmra.mrb[0].mxu0 %v150
    %v262 = vpop.f32.mrb[0].mxu0
    %v263 = vadd.f32 0.0, %v262
    %v264 = vpop.f32.mrb[0].mxu0
    %v265 = vpop.f32.mrb[0].mxu0
    %v266 = vadd.f32 0.0, %v265
    %v267 = vpop.f32.mrb[0].mxu0
    %268 = vmatprep.mubr.bf16.mxu0 0
    %269 = vmatmul.mubr.bf16.gmra.mrb[0].mxu0 %v151
    %v270 = vpop.f32.mrb[0].mxu0
    %v271 = vadd.f32 0.0, %v270
    %v272 = vpop.f32.mrb[0].mxu0
    %v273 = vpop.f32.mrb[0].mxu0
    %v274 = vadd.f32 0.0, %v273
    %v275 = vpop.f32.mrb[0].mxu0
    %276 = vmatprep.mubr.bf16.mxu0 0
    %277 = vmatmul.mubr.bf16.gmra.mrb[0].mxu0 %v152
    %v278 = vpop.f32.mrb[0].mxu0
    %v279 = vadd.f32 0.0, %v278
    %v280 = vpop.f32.mrb[0].mxu0
    %v281 = vpop.f32.mrb[0].mxu0
    %v282 = vadd.f32 0.0, %v281
    %v283 = vpop.f32.mrb[0].mxu0
    %284 = vmatprep.mubr.bf16.mxu0 0
    %285 = vmatmul.mubr.bf16.gmra.mrb[0].mxu0 %v153
    %v286 = vpop.f32.mrb[0].mxu0
    %v287 = vadd.f32 0.0, %v286
    %v288 = vpop.f32.mrb[0].mxu0
    %v289 = vpop.f32.mrb[0].mxu0
    %v290 = vadd.f32 0.0, %v289
    %v291 = vpop.f32.mrb[0].mxu0
    %292 = vmatprep.mubr.bf16.mxu0 0
    %293 = vmatmul.mubr.bf16.gmra.mrb[0].mxu0 %v154
    %v294 = vpop.f32.mrb[0].mxu0
    %v295 = vadd.f32 0.0, %v294
    %v296 = vpop.f32.mrb[0].mxu0
    %v297 = vpop.f32.mrb[0].mxu0
    %v298 = vadd.f32 0.0, %v297
    %v299 = vpop.f32.mrb[0].mxu0
    %300 = vmatprep.mubr.bf16.mxu0 0
    %301 = vmatmul.mubr.bf16.gmra.mrb[0].mxu0 %v155
    %v302 = vpop.f32.mrb[0].mxu0
    %v303 = vadd.f32 0.0, %v302
    %v304 = vpop.f32.mrb[0].mxu0
    %v305 = vpop.f32.mrb[0].mxu0
    %v306 = vadd.f32 0.0, %v305
    %v307 = vpop.f32.mrb[0].mxu0
    %308 = vdwg.mxu0
    %310 = vset.pattern.permute.xlu0 0
    %311 = vperm.xlu0 %310, %v68
    %v312 = vpop.permute.xlu0 %311
    %315 = vset.pattern.permute.xlu0 0
    %316 = vperm.xlu0 %315, %v69
    %v317 = vpop.permute.xlu0 %316
    %320 = vset.pattern.permute.xlu0 0
    %321 = vperm.xlu0 %320, %v70
    %v322 = vpop.permute.xlu0 %321
    %325 = vset.pattern.permute.xlu0 0
    %326 = vperm.xlu0 %325, %v71
    %v327 = vpop.permute.xlu0 %326
    %330 = vset.pattern.permute.xlu0 0
    %331 = vperm.xlu0 %330, %v72
    %v332 = vpop.permute.xlu0 %331
    %335 = vset.pattern.permute.xlu0 0
    %336 = vperm.xlu0 %335, %v73
    %v337 = vpop.permute.xlu0 %336
    %340 = vset.pattern.permute.xlu0 0
    %341 = vperm.xlu0 %340, %v74
    %v342 = vpop.permute.xlu0 %341
    %345 = vset.pattern.permute.xlu0 0
    %346 = vperm.xlu0 %345, %v75
    %v347 = vpop.permute.xlu0 %346
    %350 = vset.pattern.permute.xlu0 0
    %351 = vperm.xlu0 %350, %v76
    %v352 = vpop.permute.xlu0 %351
    %355 = vset.pattern.permute.xlu0 0
    %356 = vperm.xlu0 %355, %v77
    %v357 = vpop.permute.xlu0 %356
    %360 = vset.pattern.permute.xlu0 0
    %361 = vperm.xlu0 %360, %v78
    %v362 = vpop.permute.xlu0 %361
    %365 = vset.pattern.permute.xlu0 0
    %366 = vperm.xlu0 %365, %v79
    %v367 = vpop.permute.xlu0 %366
    %370 = vset.pattern.permute.xlu0 0
    %371 = vperm.xlu0 %370, %v80
    %v372 = vpop.permute.xlu0 %371
    %375 = vset.pattern.permute.xlu0 0
    %376 = vperm.xlu0 %375, %v81
    %v377 = vpop.permute.xlu0 %376
    %380 = vset.pattern.permute.xlu0 0
    %381 = vperm.xlu0 %380, %v82
    %v382 = vpop.permute.xlu0 %381
    %385 = vset.pattern.permute.xlu0 0
    %386 = vperm.xlu0 %385, %v83
    %v387 = vpop.permute.xlu0 %386
    %v389 = vmul.f32 %v247, %v312
    %v390 = vmul.f32 %v250, %v317
    %v391 = vmul.f32 %v255, %v322
    %v392 = vmul.f32 %v258, %v327
    %v393 = vmul.f32 %v263, %v332
    %v394 = vmul.f32 %v266, %v337
    %v395 = vmul.f32 %v271, %v342
    %v396 = vmul.f32 %v274, %v347
    %v397 = vmul.f32 %v279, %v352
    %v398 = vmul.f32 %v282, %v357
    %v399 = vmul.f32 %v287, %v362
    %v400 = vmul.f32 %v290, %v367
    %v401 = vmul.f32 %v295, %v372
    %v402 = vmul.f32 %v298, %v377
    %v403 = vmul.f32 %v303, %v382
    %v404 = vmul.f32 %v306, %v387
    %v405 = vpack.c.bf16 %v390, %v389
    %v406 = vpack.c.bf16 %v392, %v391
    %v407 = vpack.c.bf16 %v394, %v393
    %v408 = vpack.c.bf16 %v396, %v395
    %v409 = vpack.c.bf16 %v398, %v397
    %v410 = vpack.c.bf16 %v400, %v399
    %v411 = vpack.c.bf16 %v402, %v401
    %v412 = vpack.c.bf16 %v404, %v403
    %413 = vmatprep.subr.bf16.mxu0 0
    %414 = vmatpush1.bf16.msra.mxu0 %v405
    %415 = vmatprep.subr.bf16.mxu0 0
    %416 = vmatpush1.bf16.msra.mxu0 %v406
    %417 = vmatprep.subr.bf16.mxu0 0
    %418 = vmatpush1.bf16.msra.mxu0 %v407
    %419 = vmatprep.subr.bf16.mxu0 0
    %420 = vmatpush1.bf16.msra.mxu0 %v408
    %421 = vmatprep.subr.bf16.mxu0 0
    %422 = vmatpush1.bf16.msra.mxu0 %v409
    %423 = vmatprep.subr.bf16.mxu0 0
    %424 = vmatpush1.bf16.msra.mxu0 %v410
    %425 = vmatprep.subr.bf16.mxu0 0
    %426 = vmatpush1.bf16.msra.mxu0 %v411
    %427 = vmatprep.subr.bf16.mxu0 0
    %428 = vmatpush1.bf16.msra.mxu0 %v412
    %429 = vmatprep.subr.bf16.mxu0 0
    %430 = vmatpush1.bf16.msra.mxu0 0
    %431 = vmatprep.subr.bf16.mxu0 0
    %432 = vmatpush1.bf16.msra.mxu0 0
    %433 = vmatprep.subr.bf16.mxu0 0
    %434 = vmatpush1.bf16.msra.mxu0 0
    %435 = vmatprep.subr.bf16.mxu0 0
    %436 = vmatpush1.bf16.msra.mxu0 0
    %437 = vmatprep.subr.bf16.mxu0 0
    %438 = vmatpush1.bf16.msra.mxu0 0
    %439 = vmatprep.subr.bf16.mxu0 0
    %440 = vmatpush1.bf16.msra.mxu0 0
    %441 = vmatprep.subr.bf16.mxu0 0
    %442 = vmatpush1.bf16.msra.mxu0 0
    %443 = vmatprep.subr.bf16.mxu0 0
    %444 = vmatpush1.bf16.msra.mxu0 0
    %445 = vmatprep.mubr.bf16.mxu0 0
    %446 = vmatmul.mubr.bf16.gmra.mrb[0].mxu0 %v60
    %v447 = vpop.f32.mrb[0].mxu0
    %v448 = vadd.f32 0.0, %v447
    %v449 = vpop.f32.mrb[0].mxu0
    %v450 = vpop.f32.mrb[0].mxu0
    %v451 = vadd.f32 0.0, %v450
    %v452 = vpop.f32.mrb[0].mxu0
    %453 = vmatprep.mubr.bf16.mxu0 0
    %454 = vmatmul.mubr.bf16.gmra.mrb[0].mxu0 %v61
    %v455 = vpop.f32.mrb[0].mxu0
    %v456 = vadd.f32 0.0, %v455
    %v457 = vpop.f32.mrb[0].mxu0
    %v458 = vpop.f32.mrb[0].mxu0
    %v459 = vadd.f32 0.0, %v458
    %v460 = vpop.f32.mrb[0].mxu0
    %461 = vmatprep.mubr.bf16.mxu0 0
    %462 = vmatmul.mubr.bf16.gmra.mrb[0].mxu0 %v62
    %v463 = vpop.f32.mrb[0].mxu0
    %v464 = vadd.f32 0.0, %v463
    %v465 = vpop.f32.mrb[0].mxu0
    %v466 = vpop.f32.mrb[0].mxu0
    %v467 = vadd.f32 0.0, %v466
    %v468 = vpop.f32.mrb[0].mxu0
    %469 = vmatprep.mubr.bf16.mxu0 0
    %470 = vmatmul.mubr.bf16.gmra.mrb[0].mxu0 %v63
    %v471 = vpop.f32.mrb[0].mxu0
    %v472 = vadd.f32 0.0, %v471
    %v473 = vpop.f32.mrb[0].mxu0
    %v474 = vpop.f32.mrb[0].mxu0
    %v475 = vadd.f32 0.0, %v474
    %v476 = vpop.f32.mrb[0].mxu0
    %477 = vmatprep.mubr.bf16.mxu0 0
    %478 = vmatmul.mubr.bf16.gmra.mrb[0].mxu0 %v64
    %v479 = vpop.f32.mrb[0].mxu0
    %v480 = vadd.f32 0.0, %v479
    %v481 = vpop.f32.mrb[0].mxu0
    %v482 = vpop.f32.mrb[0].mxu0
    %v483 = vadd.f32 0.0, %v482
    %v484 = vpop.f32.mrb[0].mxu0
    %485 = vmatprep.mubr.bf16.mxu0 0
    %486 = vmatmul.mubr.bf16.gmra.mrb[0].mxu0 %v65
    %v487 = vpop.f32.mrb[0].mxu0
    %v488 = vadd.f32 0.0, %v487
    %v489 = vpop.f32.mrb[0].mxu0
    %v490 = vpop.f32.mrb[0].mxu0
    %v491 = vadd.f32 0.0, %v490
    %v492 = vpop.f32.mrb[0].mxu0
    %493 = vmatprep.mubr.bf16.mxu0 0
    %494 = vmatmul.mubr.bf16.gmra.mrb[0].mxu0 %v66
    %v495 = vpop.f32.mrb[0].mxu0
    %v496 = vadd.f32 0.0, %v495
    %v497 = vpop.f32.mrb[0].mxu0
    %v498 = vpop.f32.mrb[0].mxu0
    %v499 = vadd.f32 0.0, %v498
    %v500 = vpop.f32.mrb[0].mxu0
    %501 = vmatprep.mubr.bf16.mxu0 0
    %502 = vmatmul.mubr.bf16.gmra.mrb[0].mxu0 %v67
    %v503 = vpop.f32.mrb[0].mxu0
    %v504 = vadd.f32 0.0, %v503
    %v505 = vpop.f32.mrb[0].mxu0
    %v506 = vpop.f32.mrb[0].mxu0
    %v507 = vadd.f32 0.0, %v506
    %v508 = vpop.f32.mrb[0].mxu0
    %509 = vdwg.mxu0
    %v510 = vmul.f32 %v448, %v312
    %v511 = vmul.f32 %v451, %v317
    %v512 = vmul.f32 %v456, %v322
    %v513 = vmul.f32 %v459, %v327
    %v514 = vmul.f32 %v464, %v332
    %v515 = vmul.f32 %v467, %v337
    %v516 = vmul.f32 %v472, %v342
    %v517 = vmul.f32 %v475, %v347
    %v518 = vmul.f32 %v480, %v352
    %v519 = vmul.f32 %v483, %v357
    %v520 = vmul.f32 %v488, %v362
    %v521 = vmul.f32 %v491, %v367
    %v522 = vmul.f32 %v496, %v372
    %v523 = vmul.f32 %v499, %v377
    %v524 = vmul.f32 %v504, %v382
    %v525 = vmul.f32 %v507, %v387
    %v526 = vld [vmem:[%s3] sm:$0x1]
    %v528 = vlaneseq
    %v529 = vshrl.u32 %v528, 7
    %v530 = vsub.s32 0, %v529
    %v531 = vrot.slane %v526, %v530
    %v533 = vadd.f32 %v510, %v531
    %v534 = vadd.f32 %v511, %v531
    %v535 = vadd.f32 %v512, %v531
    %v536 = vadd.f32 %v513, %v531
    %v537 = vadd.f32 %v514, %v531
    %v538 = vadd.f32 %v515, %v531
    %v539 = vadd.f32 %v516, %v531
    %v540 = vadd.f32 %v517, %v531
    %v541 = vadd.f32 %v518, %v531
    %v542 = vadd.f32 %v519, %v531
    %v543 = vadd.f32 %v520, %v531
    %v544 = vadd.f32 %v521, %v531
    %v545 = vadd.f32 %v522, %v531
    %v546 = vadd.f32 %v523, %v531
    %v547 = vadd.f32 %v524, %v531
    %v548 = vadd.f32 %v525, %v531
    %vm549 = vcmp.gt.f32.partialorder %v533, 0.0
    %vm550 = vcmp.gt.f32.partialorder %v534, 0.0
    %vm551 = vcmp.gt.f32.partialorder %v535, 0.0
    %vm552 = vcmp.gt.f32.partialorder %v536, 0.0
    %vm553 = vcmp.gt.f32.partialorder %v537, 0.0
    %vm554 = vcmp.gt.f32.partialorder %v538, 0.0
    %vm555 = vcmp.gt.f32.partialorder %v539, 0.0
    %vm556 = vcmp.gt.f32.partialorder %v540, 0.0
    %vm557 = vcmp.gt.f32.partialorder %v541, 0.0
    %vm558 = vcmp.gt.f32.partialorder %v542, 0.0
    %vm559 = vcmp.gt.f32.partialorder %v543, 0.0
    %vm560 = vcmp.gt.f32.partialorder %v544, 0.0
    %vm561 = vcmp.gt.f32.partialorder %v545, 0.0
    %vm562 = vcmp.gt.f32.partialorder %v546, 0.0
    %vm563 = vcmp.gt.f32.partialorder %v547, 0.0
    %vm564 = vcmp.gt.f32.partialorder %v548, 0.0
    %v565 = vmul.f32 %v533, 1.442695
    %v566 = vpow.pop %v565
    %v567 = vmul.f32 %v534, 1.442695
    %v568 = vpow.pop %v567
    %v569 = vmul.f32 %v535, 1.442695
    %v570 = vpow.pop %v569
    %v571 = vmul.f32 %v536, 1.442695
    %v572 = vpow.pop %v571
    %v573 = vmul.f32 %v537, 1.442695
    %v574 = vpow.pop %v573
    %v575 = vmul.f32 %v538, 1.442695
    %v576 = vpow.pop %v575
    %v577 = vmul.f32 %v539, 1.442695
    %v578 = vpow.pop %v577
    %v579 = vmul.f32 %v540, 1.442695
    %v580 = vpow.pop %v579
    %v581 = vmul.f32 %v541, 1.442695
    %v582 = vpow.pop %v581
    %v583 = vmul.f32 %v542, 1.442695
    %v584 = vpow.pop %v583
    %v585 = vmul.f32 %v543, 1.442695
    %v586 = vpow.pop %v585
    %v587 = vmul.f32 %v544, 1.442695
    %v588 = vpow.pop %v587
    %v589 = vmul.f32 %v545, 1.442695
    %v590 = vpow.pop %v589
    %v591 = vmul.f32 %v546, 1.442695
    %v592 = vpow.pop %v591
    %v593 = vmul.f32 %v547, 1.442695
    %v594 = vpow.pop %v593
    %v595 = vmul.f32 %v548, 1.442695
    %v596 = vpow.pop %v595
    %v597 = vsub.f32 %v566, 1.0
    %v598 = vsub.f32 %v568, 1.0
    %v599 = vsub.f32 %v570, 1.0
    %v600 = vsub.f32 %v572, 1.0
    %v601 = vsub.f32 %v574, 1.0
    %v602 = vsub.f32 %v576, 1.0
    %v603 = vsub.f32 %v578, 1.0
    %v604 = vsub.f32 %v580, 1.0
    %v605 = vsub.f32 %v582, 1.0
    %v606 = vsub.f32 %v584, 1.0
    %v607 = vsub.f32 %v586, 1.0
    %v608 = vsub.f32 %v588, 1.0
    %v609 = vsub.f32 %v590, 1.0
    %v610 = vsub.f32 %v592, 1.0
    %v611 = vsub.f32 %v594, 1.0
    %v612 = vsub.f32 %v596, 1.0
    %v613 = vsel %vm549, %v533, %v597
    %v614 = vsel %vm550, %v534, %v598
    %v615 = vsel %vm551, %v535, %v599
    %v616 = vsel %vm552, %v536, %v600
    %v617 = vsel %vm553, %v537, %v601
    %v618 = vsel %vm554, %v538, %v602
    %v619 = vsel %vm555, %v539, %v603
    %v620 = vsel %vm556, %v540, %v604
    %v621 = vsel %vm557, %v541, %v605
    %v622 = vsel %vm558, %v542, %v606
    %v623 = vsel %vm559, %v543, %v607
    %v624 = vsel %vm560, %v544, %v608
    %v625 = vsel %vm561, %v545, %v609
    %v626 = vsel %vm562, %v546, %v610
    %v627 = vsel %vm563, %v547, %v611
    %v628 = vsel %vm564, %v548, %v612
    %v629 = vpack.c.bf16 %v614, %v613
    %v630 = vpack.c.bf16 %v616, %v615
    %v631 = vpack.c.bf16 %v618, %v617
    %v632 = vpack.c.bf16 %v620, %v619
    %v633 = vpack.c.bf16 %v622, %v621
    %v634 = vpack.c.bf16 %v624, %v623
    %v635 = vpack.c.bf16 %v626, %v625
    %v636 = vpack.c.bf16 %v628, %v627
    %v637 = vld [vmem:[#allocation5] sm:$0xf]
    %v638 = vld [vmem:[#allocation5 + $0x4] sm:$0xf]
    %v639 = vld [vmem:[#allocation5 + $0x8] sm:$0xf]
    %v640 = vld [vmem:[#allocation5 + $0xc] sm:$0xf]
    %v641 = vld [vmem:[#allocation5 + $0x10] sm:$0xf]
    %v642 = vld [vmem:[#allocation5 + $0x14] sm:$0xf]
    %v643 = vld [vmem:[#allocation5 + $0x18] sm:$0xf]
    %v644 = vld [vmem:[#allocation5 + $0x1c] sm:$0xf]
    %v645 = vld [vmem:[#allocation5 + $0x20] sm:$0xf]
    %v646 = vld [vmem:[#allocation5 + $0x24] sm:$0xf]
    %v647 = vld [vmem:[#allocation5 + $0x28] sm:$0xf]
    %v648 = vld [vmem:[#allocation5 + $0x2c] sm:$0xf]
    %v649 = vld [vmem:[#allocation5 + $0x30] sm:$0xf]
    %v650 = vld [vmem:[#allocation5 + $0x34] sm:$0xf]
    %v651 = vld [vmem:[#allocation5 + $0x38] sm:$0xf]
    %v652 = vld [vmem:[#allocation5 + $0x3c] sm:$0xf]
    %v669 = vunpack.c.l.b16 %v637
    %v670 = vunpack.c.l.b16 %v638
    %v671 = vunpack.c.l.b16 %v639
    %v672 = vunpack.c.l.b16 %v640
    %v673 = vunpack.c.l.b16 %v641
    %v674 = vunpack.c.l.b16 %v642
    %v675 = vunpack.c.l.b16 %v643
    %v676 = vunpack.c.l.b16 %v644
    %v677 = vunpack.c.l.b16 %v645
    %v678 = vunpack.c.l.b16 %v646
    %v679 = vunpack.c.l.b16 %v647
    %v680 = vunpack.c.l.b16 %v648
    %v681 = vunpack.c.l.b16 %v649
    %v682 = vunpack.c.l.b16 %v650
    %v683 = vunpack.c.l.b16 %v651
    %v684 = vunpack.c.l.b16 %v652
    %v685 = vpack.c.b16 %v670, %v669
    %v686 = vpack.c.b16 %v672, %v671
    %v687 = vpack.c.b16 %v674, %v673
    %v688 = vpack.c.b16 %v676, %v675
    %v689 = vpack.c.b16 %v678, %v677
    %v690 = vpack.c.b16 %v680, %v679
    %v691 = vpack.c.b16 %v682, %v681
    %v692 = vpack.c.b16 %v684, %v683
    %701 = vmatprep.subr.bf16.mxu0 0
    %702 = vmatpush1.bf16.msra.mxu0 %v685
    %703 = vmatprep.subr.bf16.mxu0 0
    %704 = vmatpush1.bf16.msra.mxu0 %v686
    %705 = vmatprep.subr.bf16.mxu0 0
    %706 = vmatpush1.bf16.msra.mxu0 %v687
    %707 = vmatprep.subr.bf16.mxu0 0
    %708 = vmatpush1.bf16.msra.mxu0 %v688
    %709 = vmatprep.subr.bf16.mxu0 0
    %710 = vmatpush1.bf16.msra.mxu0 %v689
    %711 = vmatprep.subr.bf16.mxu0 0
    %712 = vmatpush1.bf16.msra.mxu0 %v690
    %713 = vmatprep.subr.bf16.mxu0 0
    %714 = vmatpush1.bf16.msra.mxu0 %v691
    %715 = vmatprep.subr.bf16.mxu0 0
    %716 = vmatpush1.bf16.msra.mxu0 %v692
    %717 = vmatprep.subr.bf16.mxu0 0
    %718 = vmatpush1.bf16.msra.mxu0 0
    %719 = vmatprep.subr.bf16.mxu0 0
    %720 = vmatpush1.bf16.msra.mxu0 0
    %721 = vmatprep.subr.bf16.mxu0 0
    %722 = vmatpush1.bf16.msra.mxu0 0
    %723 = vmatprep.subr.bf16.mxu0 0
    %724 = vmatpush1.bf16.msra.mxu0 0
    %725 = vmatprep.subr.bf16.mxu0 0
    %726 = vmatpush1.bf16.msra.mxu0 0
    %727 = vmatprep.subr.bf16.mxu0 0
    %728 = vmatpush1.bf16.msra.mxu0 0
    %729 = vmatprep.subr.bf16.mxu0 0
    %730 = vmatpush1.bf16.msra.mxu0 0
    %731 = vmatprep.subr.bf16.mxu0 0
    %732 = vmatpush1.bf16.msra.mxu0 0
    %733 = vmatprep.mubr.bf16.mxu0 0
    %734 = vmatmul.mubr.bf16.gmra.mrb[0].mxu0 %v629
    %v735 = vpop.f32.mrb[0].mxu0
    %v736 = vadd.f32 0.0, %v735
    %v737 = vpop.f32.mrb[0].mxu0
    %v738 = vpop.f32.mrb[0].mxu0
    %v739 = vadd.f32 0.0, %v738
    %v740 = vpop.f32.mrb[0].mxu0
    %741 = vmatprep.mubr.bf16.mxu0 0
    %742 = vmatmul.mubr.bf16.gmra.mrb[0].mxu0 %v630
    %v743 = vpop.f32.mrb[0].mxu0
    %v744 = vadd.f32 0.0, %v743
    %v745 = vpop.f32.mrb[0].mxu0
    %v746 = vpop.f32.mrb[0].mxu0
    %v747 = vadd.f32 0.0, %v746
    %v748 = vpop.f32.mrb[0].mxu0
    %749 = vmatprep.mubr.bf16.mxu0 0
    %750 = vmatmul.mubr.bf16.gmra.mrb[0].mxu0 %v631
    %v751 = vpop.f32.mrb[0].mxu0
    %v752 = vadd.f32 0.0, %v751
    %v753 = vpop.f32.mrb[0].mxu0
    %v754 = vpop.f32.mrb[0].mxu0
    %v755 = vadd.f32 0.0, %v754
    %v756 = vpop.f32.mrb[0].mxu0
    %757 = vmatprep.mubr.bf16.mxu0 0
    %758 = vmatmul.mubr.bf16.gmra.mrb[0].mxu0 %v632
    %v759 = vpop.f32.mrb[0].mxu0
    %v760 = vadd.f32 0.0, %v759
    %v761 = vpop.f32.mrb[0].mxu0
    %v762 = vpop.f32.mrb[0].mxu0
    %v763 = vadd.f32 0.0, %v762
    %v764 = vpop.f32.mrb[0].mxu0
    %765 = vmatprep.mubr.bf16.mxu0 0
    %766 = vmatmul.mubr.bf16.gmra.mrb[0].mxu0 %v633
    %v767 = vpop.f32.mrb[0].mxu0
    %v768 = vadd.f32 0.0, %v767
    %v769 = vpop.f32.mrb[0].mxu0
    %v770 = vpop.f32.mrb[0].mxu0
    %v771 = vadd.f32 0.0, %v770
    %v772 = vpop.f32.mrb[0].mxu0
    %773 = vmatprep.mubr.bf16.mxu0 0
    %774 = vmatmul.mubr.bf16.gmra.mrb[0].mxu0 %v634
    %v775 = vpop.f32.mrb[0].mxu0
    %v776 = vadd.f32 0.0, %v775
    %v777 = vpop.f32.mrb[0].mxu0
    %v778 = vpop.f32.mrb[0].mxu0
    %v779 = vadd.f32 0.0, %v778
    %v780 = vpop.f32.mrb[0].mxu0
    %781 = vmatprep.mubr.bf16.mxu0 0
    %782 = vmatmul.mubr.bf16.gmra.mrb[0].mxu0 %v635
    %v783 = vpop.f32.mrb[0].mxu0
    %v784 = vadd.f32 0.0, %v783
    %v785 = vpop.f32.mrb[0].mxu0
    %v786 = vpop.f32.mrb[0].mxu0
    %v787 = vadd.f32 0.0, %v786
    %v788 = vpop.f32.mrb[0].mxu0
    %789 = vmatprep.mubr.bf16.mxu0 0
    %790 = vmatmul.mubr.bf16.gmra.mrb[0].mxu0 %v636
    %v791 = vpop.f32.mrb[0].mxu0
    %v792 = vadd.f32 0.0, %v791
    %v793 = vpop.f32.mrb[0].mxu0
    %v794 = vpop.f32.mrb[0].mxu0
    %v795 = vadd.f32 0.0, %v794
    %v796 = vpop.f32.mrb[0].mxu0
    %797 = vdwg.mxu0
    %v798 = vmul.f32 %v736, %v312
    %v799 = vmul.f32 %v739, %v317
    %v800 = vmul.f32 %v744, %v322
    %v801 = vmul.f32 %v747, %v327
    %v802 = vmul.f32 %v752, %v332
    %v803 = vmul.f32 %v755, %v337
    %v804 = vmul.f32 %v760, %v342
    %v805 = vmul.f32 %v763, %v347
    %v806 = vmul.f32 %v768, %v352
    %v807 = vmul.f32 %v771, %v357
    %v808 = vmul.f32 %v776, %v362
    %v809 = vmul.f32 %v779, %v367
    %v810 = vmul.f32 %v784, %v372
    %v811 = vmul.f32 %v787, %v377
    %v812 = vmul.f32 %v792, %v382
    %v813 = vmul.f32 %v795, %v387
    %v814 = vpack.c.bf16 %v799, %v798
    %v815 = vpack.c.bf16 %v801, %v800
    %v816 = vpack.c.bf16 %v803, %v802
    %v817 = vpack.c.bf16 %v805, %v804
    %v818 = vpack.c.bf16 %v807, %v806
    %v819 = vpack.c.bf16 %v809, %v808
    %v820 = vpack.c.bf16 %v811, %v810
    %v821 = vpack.c.bf16 %v813, %v812
    %822 = vmatprep.subr.bf16.mxu0 0
    %823 = vmatpush1.bf16.msra.mxu0 %v814
    %824 = vmatprep.subr.bf16.mxu0 0
    %825 = vmatpush1.bf16.msra.mxu0 %v815
    %826 = vmatprep.subr.bf16.mxu0 0
    %827 = vmatpush1.bf16.msra.mxu0 %v816
    %828 = vmatprep.subr.bf16.mxu0 0
    %829 = vmatpush1.bf16.msra.mxu0 %v817
    %830 = vmatprep.subr.bf16.mxu0 0
    %831 = vmatpush1.bf16.msra.mxu0 %v818
    %832 = vmatprep.subr.bf16.mxu0 0
    %833 = vmatpush1.bf16.msra.mxu0 %v819
    %834 = vmatprep.subr.bf16.mxu0 0
    %835 = vmatpush1.bf16.msra.mxu0 %v820
    %836 = vmatprep.subr.bf16.mxu0 0
    %837 = vmatpush1.bf16.msra.mxu0 %v821
    %838 = vmatprep.subr.bf16.mxu0 0
    %839 = vmatpush1.bf16.msra.mxu0 0
    %840 = vmatprep.subr.bf16.mxu0 0
    %841 = vmatpush1.bf16.msra.mxu0 0
    %842 = vmatprep.subr.bf16.mxu0 0
    %843 = vmatpush1.bf16.msra.mxu0 0
    %844 = vmatprep.subr.bf16.mxu0 0
    %845 = vmatpush1.bf16.msra.mxu0 0
    %846 = vmatprep.subr.bf16.mxu0 0
    %847 = vmatpush1.bf16.msra.mxu0 0
    %848 = vmatprep.subr.bf16.mxu0 0
    %849 = vmatpush1.bf16.msra.mxu0 0
    %850 = vmatprep.subr.bf16.mxu0 0
    %851 = vmatpush1.bf16.msra.mxu0 0
    %852 = vmatprep.subr.bf16.mxu0 0
    %853 = vmatpush1.bf16.msra.mxu0 0
    %854 = vmatprep.mubr.bf16.mxu0 0
    %855 = vmatmul.mubr.bf16.gmra.mrb[0].mxu0 %v60
    %v856 = vpop.f32.mrb[0].mxu0
    %v857 = vadd.f32 0.0, %v856
    %v858 = vpop.f32.mrb[0].mxu0
    %v859 = vpop.f32.mrb[0].mxu0
    %v860 = vadd.f32 0.0, %v859
    %v861 = vpop.f32.mrb[0].mxu0
    %862 = vmatprep.mubr.bf16.mxu0 0
    %863 = vmatmul.mubr.bf16.gmra.mrb[0].mxu0 %v61
    %v864 = vpop.f32.mrb[0].mxu0
    %v865 = vadd.f32 0.0, %v864
    %v866 = vpop.f32.mrb[0].mxu0
    %v867 = vpop.f32.mrb[0].mxu0
    %v868 = vadd.f32 0.0, %v867
    %v869 = vpop.f32.mrb[0].mxu0
    %870 = vmatprep.mubr.bf16.mxu0 0
    %871 = vmatmul.mubr.bf16.gmra.mrb[0].mxu0 %v62
    %v872 = vpop.f32.mrb[0].mxu0
    %v873 = vadd.f32 0.0, %v872
    %v874 = vpop.f32.mrb[0].mxu0
    %v875 = vpop.f32.mrb[0].mxu0
    %v876 = vadd.f32 0.0, %v875
    %v877 = vpop.f32.mrb[0].mxu0
    %878 = vmatprep.mubr.bf16.mxu0 0
    %879 = vmatmul.mubr.bf16.gmra.mrb[0].mxu0 %v63
    %v880 = vpop.f32.mrb[0].mxu0
    %v881 = vadd.f32 0.0, %v880
    %v882 = vpop.f32.mrb[0].mxu0
    %v883 = vpop.f32.mrb[0].mxu0
    %v884 = vadd.f32 0.0, %v883
    %v885 = vpop.f32.mrb[0].mxu0
    %886 = vmatprep.mubr.bf16.mxu0 0
    %887 = vmatmul.mubr.bf16.gmra.mrb[0].mxu0 %v64
    %v888 = vpop.f32.mrb[0].mxu0
    %v889 = vadd.f32 0.0, %v888
    %v890 = vpop.f32.mrb[0].mxu0
    %v891 = vpop.f32.mrb[0].mxu0
    %v892 = vadd.f32 0.0, %v891
    %v893 = vpop.f32.mrb[0].mxu0
    %894 = vmatprep.mubr.bf16.mxu0 0
    %895 = vmatmul.mubr.bf16.gmra.mrb[0].mxu0 %v65
    %v896 = vpop.f32.mrb[0].mxu0
    %v897 = vadd.f32 0.0, %v896
    %v898 = vpop.f32.mrb[0].mxu0
    %v899 = vpop.f32.mrb[0].mxu0
    %v900 = vadd.f32 0.0, %v899
    %v901 = vpop.f32.mrb[0].mxu0
    %902 = vmatprep.mubr.bf16.mxu0 0
    %903 = vmatmul.mubr.bf16.gmra.mrb[0].mxu0 %v66
    %v904 = vpop.f32.mrb[0].mxu0
    %v905 = vadd.f32 0.0, %v904
    %v906 = vpop.f32.mrb[0].mxu0
    %v907 = vpop.f32.mrb[0].mxu0
    %v908 = vadd.f32 0.0, %v907
    %v909 = vpop.f32.mrb[0].mxu0
    %910 = vmatprep.mubr.bf16.mxu0 0
    %911 = vmatmul.mubr.bf16.gmra.mrb[0].mxu0 %v67
    %v912 = vpop.f32.mrb[0].mxu0
    %v913 = vadd.f32 0.0, %v912
    %v914 = vpop.f32.mrb[0].mxu0
    %v915 = vpop.f32.mrb[0].mxu0
    %v916 = vadd.f32 0.0, %v915
    %v917 = vpop.f32.mrb[0].mxu0
    %918 = vdwg.mxu0
    %v919 = vmul.f32 %v857, %v312
    %v920 = vmul.f32 %v860, %v317
    %v921 = vmul.f32 %v865, %v322
    %v922 = vmul.f32 %v868, %v327
    %v923 = vmul.f32 %v873, %v332
    %v924 = vmul.f32 %v876, %v337
    %v925 = vmul.f32 %v881, %v342
    %v926 = vmul.f32 %v884, %v347
    %v927 = vmul.f32 %v889, %v352
    %v928 = vmul.f32 %v892, %v357
    %v929 = vmul.f32 %v897, %v362
    %v930 = vmul.f32 %v900, %v367
    %v931 = vmul.f32 %v905, %v372
    %v932 = vmul.f32 %v908, %v377
    %v933 = vmul.f32 %v913, %v382
    %v934 = vmul.f32 %v916, %v387
    %v935 = vld [vmem:[%s5] sm:$0x1]
    %v937 = vlaneseq
    %v938 = vshrl.u32 %v937, 7
    %v939 = vsub.s32 0, %v938
    %v940 = vrot.slane %v935, %v939
    %v942 = vadd.f32 %v919, %v940
    %v943 = vadd.f32 %v920, %v940
    %v944 = vadd.f32 %v921, %v940
    %v945 = vadd.f32 %v922, %v940
    %v946 = vadd.f32 %v923, %v940
    %v947 = vadd.f32 %v924, %v940
    %v948 = vadd.f32 %v925, %v940
    %v949 = vadd.f32 %v926, %v940
    %v950 = vadd.f32 %v927, %v940
    %v951 = vadd.f32 %v928, %v940
    %v952 = vadd.f32 %v929, %v940
    %v953 = vadd.f32 %v930, %v940
    %v954 = vadd.f32 %v931, %v940
    %v955 = vadd.f32 %v932, %v940
    %v956 = vadd.f32 %v933, %v940
    %v957 = vadd.f32 %v934, %v940
    %vm958 = vcmp.gt.f32.partialorder %v942, 0.0
    %vm959 = vcmp.gt.f32.partialorder %v943, 0.0
    %vm960 = vcmp.gt.f32.partialorder %v944, 0.0
    %vm961 = vcmp.gt.f32.partialorder %v945, 0.0
    %vm962 = vcmp.gt.f32.partialorder %v946, 0.0
    %vm963 = vcmp.gt.f32.partialorder %v947, 0.0
    %vm964 = vcmp.gt.f32.partialorder %v948, 0.0
    %vm965 = vcmp.gt.f32.partialorder %v949, 0.0
    %vm966 = vcmp.gt.f32.partialorder %v950, 0.0
    %vm967 = vcmp.gt.f32.partialorder %v951, 0.0
    %vm968 = vcmp.gt.f32.partialorder %v952, 0.0
    %vm969 = vcmp.gt.f32.partialorder %v953, 0.0
    %vm970 = vcmp.gt.f32.partialorder %v954, 0.0
    %vm971 = vcmp.gt.f32.partialorder %v955, 0.0
    %vm972 = vcmp.gt.f32.partialorder %v956, 0.0
    %vm973 = vcmp.gt.f32.partialorder %v957, 0.0
    %v974 = vmul.f32 %v942, 1.442695
    %v975 = vpow.pop %v974
    %v976 = vmul.f32 %v943, 1.442695
    %v977 = vpow.pop %v976
    %v978 = vmul.f32 %v944, 1.442695
    %v979 = vpow.pop %v978
    %v980 = vmul.f32 %v945, 1.442695
    %v981 = vpow.pop %v980
    %v982 = vmul.f32 %v946, 1.442695
    %v983 = vpow.pop %v982
    %v984 = vmul.f32 %v947, 1.442695
    %v985 = vpow.pop %v984
    %v986 = vmul.f32 %v948, 1.442695
    %v987 = vpow.pop %v986
    %v988 = vmul.f32 %v949, 1.442695
    %v989 = vpow.pop %v988
    %v990 = vmul.f32 %v950, 1.442695
    %v991 = vpow.pop %v990
    %v992 = vmul.f32 %v951, 1.442695
    %v993 = vpow.pop %v992
    %v994 = vmul.f32 %v952, 1.442695
    %v995 = vpow.pop %v994
    %v996 = vmul.f32 %v953, 1.442695
    %v997 = vpow.pop %v996
    %v998 = vmul.f32 %v954, 1.442695
    %v999 = vpow.pop %v998
    %v1000 = vmul.f32 %v955, 1.442695
    %v1001 = vpow.pop %v1000
    %v1002 = vmul.f32 %v956, 1.442695
    %v1003 = vpow.pop %v1002
    %v1004 = vmul.f32 %v957, 1.442695
    %v1005 = vpow.pop %v1004
    %v1006 = vsub.f32 %v975, 1.0
    %v1007 = vsub.f32 %v977, 1.0
    %v1008 = vsub.f32 %v979, 1.0
    %v1009 = vsub.f32 %v981, 1.0
    %v1010 = vsub.f32 %v983, 1.0
    %v1011 = vsub.f32 %v985, 1.0
    %v1012 = vsub.f32 %v987, 1.0
    %v1013 = vsub.f32 %v989, 1.0
    %v1014 = vsub.f32 %v991, 1.0
    %v1015 = vsub.f32 %v993, 1.0
    %v1016 = vsub.f32 %v995, 1.0
    %v1017 = vsub.f32 %v997, 1.0
    %v1018 = vsub.f32 %v999, 1.0
    %v1019 = vsub.f32 %v1001, 1.0
    %v1020 = vsub.f32 %v1003, 1.0
    %v1021 = vsub.f32 %v1005, 1.0
    %v1022 = vsel %vm958, %v942, %v1006
    %v1023 = vsel %vm959, %v943, %v1007
    %v1024 = vsel %vm960, %v944, %v1008
    %v1025 = vsel %vm961, %v945, %v1009
    %v1026 = vsel %vm962, %v946, %v1010
    %v1027 = vsel %vm963, %v947, %v1011
    %v1028 = vsel %vm964, %v948, %v1012
    %v1029 = vsel %vm965, %v949, %v1013
    %v1030 = vsel %vm966, %v950, %v1014
    %v1031 = vsel %vm967, %v951, %v1015
    %v1032 = vsel %vm968, %v952, %v1016
    %v1033 = vsel %vm969, %v953, %v1017
    %v1034 = vsel %vm970, %v954, %v1018
    %v1035 = vsel %vm971, %v955, %v1019
    %v1036 = vsel %vm972, %v956, %v1020
    %v1037 = vsel %vm973, %v957, %v1021
    %1038 = vst [vmem:[#allocation7] sm:$0xff] %v1022
    %1039 = vst [vmem:[#allocation7 + $0x8] sm:$0xff] %v1023
    %1040 = vst [vmem:[#allocation7 + $0x10] sm:$0xff] %v1024
    %1041 = vst [vmem:[#allocation7 + $0x18] sm:$0xff] %v1025
    %1042 = vst [vmem:[#allocation7 + $0x20] sm:$0xff] %v1026
    %1043 = vst [vmem:[#allocation7 + $0x28] sm:$0xff] %v1027
    %1044 = vst [vmem:[#allocation7 + $0x30] sm:$0xff] %v1028
    %1045 = vst [vmem:[#allocation7 + $0x38] sm:$0xff] %v1029
    %1046 = vst [vmem:[#allocation7 + $0x40] sm:$0xff] %v1030
    %1047 = vst [vmem:[#allocation7 + $0x48] sm:$0xff] %v1031
    %1048 = vst [vmem:[#allocation7 + $0x50] sm:$0xff] %v1032
    %1049 = vst [vmem:[#allocation7 + $0x58] sm:$0xff] %v1033
    %1050 = vst [vmem:[#allocation7 + $0x60] sm:$0xff] %v1034
    %1051 = vst [vmem:[#allocation7 + $0x68] sm:$0xff] %v1035
    %1052 = vst [vmem:[#allocation7 + $0x70] sm:$0xff] %v1036
    %1053 = vst [vmem:[#allocation7 + $0x78] sm:$0xff] %v1037
    // Predicated region
    $region38: #{tpu_custom_call.1} parent=1 // pred_check
      _
    $region39: #{tpu_custom_call.1} parent=1 // pred_check_branch
      %1055 = sbr.rel (0) target = $region41
    $region40: #{tpu_custom_call.1} parent=1 // pred_region
      %s1057 = ssub.s32 2048, 2048
      %1058 = vsyncadd [#allocation4], %s1057
      %s1059 = sshll.u32 [#allocation7], 4
      %s1060 = int_to_ptr.vmem [resolvable:$true] %s1059
      %1065 = dma.vmem_to_hbm [thread:$0]  %s1060, 2048, %s7, [#allocation4], 128, 128, 8
    $region41: #{tpu_custom_call.1} parent=1 // pred_fallthru
      _
    // Predicated region
    $region42: #{tpu_custom_call.1} parent=1 // pred_check
      _
    $region43: #{tpu_custom_call.1} parent=1 // pred_check_branch
      %1067 = sbr.rel (0) target = $region45
    $region44: #{tpu_custom_call.1} parent=1 // pred_region
      %1068 = dma.done [#allocation4], 2048
    $region45: #{tpu_custom_call.1} parent=1 // pred_fallthru
      _
    %1069 = vsyncpa [#allocation3], 1
    %1070 = vsyncpa [#allocation6], 1
    %1071 = vsyncpa [#allocation4], 1

</llo_original>
